<compile_context>
chip_gen: v7x
topology: tpu7x:2x2x1
jax: 0.10.0
libtpu: 0.0.40
codegen_flags: <defaults>
</compile_context>

<pallas_src>
import functools

import jax
import jax.numpy as jnp
from jax.experimental import pallas as pl
from jax.experimental.pallas import tpu as pltpu

EPS = 1e-5


def _round_up(x, m):
    return ((x + m - 1) // m) * m


def _vmem_capacity_bytes():
    """Per-core VMEM capacity (generation-aware), conservative fallback if unknown."""
    try:
        cap = getattr(pltpu.get_tpu_info(), "vmem_capacity_bytes", None)
        if cap:
            return int(cap)
    except Exception:
        pass
    return 64 * 1024 * 1024          # v7x-class conservative default


@functools.lru_cache(maxsize=1)
def _single_buffering_supported():
    """Probe whether pipeline_mode=pl.Buffered(1) lowers on this jax/libtpu stack."""
    if not hasattr(pl, "Buffered"):
        return False

    def _copy(x_ref, o_ref):
        o_ref[...] = x_ref[...]

    try:
        out = pl.pallas_call(
            _copy,
            out_shape=jax.ShapeDtypeStruct((8, 128), jnp.float32),
            grid=(1,),
            in_specs=[pl.BlockSpec((8, 128), lambda i: (0, 0),
                                   pipeline_mode=pl.Buffered(1))],
            out_specs=pl.BlockSpec((8, 128), lambda i: (0, 0)),
        )(jnp.zeros((8, 128), jnp.float32))
        jax.block_until_ready(out)
        return True
    except Exception:
        return False


def _choose_tiles(n_rows, d_pad, in_b, mm_b, has_residual, budget, w_min_buf,
                  force_tn=None):
    """Pick (row_tile, column_tile).

    Prefer a fully-resident weight (tn == d_pad: one HBM pass, single-buffered when
    supported).  Otherwise pick the (tn, row_tile) pair minimizing weight HBM traffic,
    with tn >= 256 preferred for the 256-wide MXU and >= 2 row tiles so the "parallel"
    row axis can split across v7x's two TensorCores.
    """
    target_rows = 1024 if in_b <= 2 else 512
    row_cap = max(16, min(target_rows, _round_up((n_rows + 1) // 2, 16)))

    def vmem_bytes(rt, tn, w_buf):
        io = 2 * rt * d_pad * in_b * (2 if has_residual else 1)   # h (+ r), double-buffered
        io += 2 * rt * tn * in_b                                   # mixer-output tile
        io += 2 * rt * d_pad * 4                                   # fp32 residual output
        wbytes = w_buf * d_pad * tn * mm_b                         # weight tile(s)
        scratch = rt * d_pad * mm_b                                # cached `normed`
        params = 2 * (2 * d_pad + tn) * 4                          # gamma/beta + bias
        return io + wbytes + scratch + params

    def fit_rows(tn, w_buf):
        rt = row_cap
        while rt > 16 and vmem_bytes(rt, tn, w_buf) > budget:
            rt = max(16, _round_up(rt // 2, 16))
        return rt

    if force_tn is not None:
        candidates = [force_tn]
    elif d_pad * d_pad * mm_b * w_min_buf <= budget // 2:
        candidates = [d_pad]                    # full weight resident
    else:
        candidates = [c for c in (1024, 512, 256, 128)
                      if c < d_pad and d_pad % c == 0] or [128]

    best = None
    for tn in candidates:
        w_buf = w_min_buf if tn == d_pad else 2
        rt = fit_rows(tn, w_buf)
        weight_passes = 1 if tn == d_pad else max(1, -(-n_rows // rt))
        score = (weight_passes * d_pad * d_pad * mm_b, -rt, -tn)
        if best is None or score < best[0]:
            best = (score, rt, tn)
    _, row_tile, tn = best

    if row_tile > n_rows:                       # never use a block larger than the array
        row_tile = max(8, (n_rows // 8) * 8)
    return row_tile, tn


def _add_ln(res, gb_ref, out_r_ref, normed_ref, *, inv_d, n_valid, lanes):
    """res (f32): write fp32 residual output, LayerNorm it, cache `normed` in scratch."""
    out_r_ref[...] = res                                          # residual_in_fp32
    # Two-pass (centered) statistics: matches nn.LayerNorm numerics; padded lanes of
    # `res` are exactly zero so the mean over `lanes` divided by the real D is exact.
    mean = jnp.sum(res, axis=-1, keepdims=True) * inv_d
    centered = res - mean
    if n_valid != lanes:
        # Padded lanes of `centered` would be -mean; mask them so the variance (and the
        # matmul input) only see the real D features.
        lane = jax.lax.broadcasted_iota(jnp.int32, centered.shape, centered.ndim - 1)
        centered = jnp.where(lane < n_valid, centered, 0.0)
    var = jnp.sum(centered * centered, axis=-1, keepdims=True) * inv_d
    inv = jax.lax.rsqrt(var + EPS)                                # EUP slot
    normed = centered * inv * gb_ref[0:1, :] + gb_ref[1:2, :]
    normed_ref[...] = normed.astype(normed_ref.dtype)


def _mblock_kernel(h_ref, r_ref, w_ref, gb_ref, bias_ref,
                   out_h_ref, out_r_ref, normed_ref, *, inv_d, n_valid, lanes):
    @pl.when(pl.program_id(1) == 0)   # Add + LN once per row tile; reuse for every column tile
    def _():
        res = h_ref[...].astype(jnp.float32) + r_ref[...].astype(jnp.float32)
        _add_ln(res, gb_ref, out_r_ref, normed_ref,
                inv_d=inv_d, n_valid=n_valid, lanes=lanes)

    # Mixer: Linear(dim, dim) column tile on the MXU, f32 accumulation.
    out = jnp.dot(normed_ref[...], w_ref[...], preferred_element_type=jnp.float32)
    out_h_ref[...] = (out + bias_ref[...]).astype(out_h_ref.dtype)


def _mblock_kernel_no_residual(h_ref, w_ref, gb_ref, bias_ref,
                               out_h_ref, out_r_ref, normed_ref, *, inv_d, n_valid, lanes):
    @pl.when(pl.program_id(1) == 0)
    def _():
        res = h_ref[...].astype(jnp.float32)
        _add_ln(res, gb_ref, out_r_ref, normed_ref,
                inv_d=inv_d, n_valid=n_valid, lanes=lanes)

    out = jnp.dot(normed_ref[...], w_ref[...], preferred_element_type=jnp.float32)
    out_h_ref[...] = (out + bias_ref[...]).astype(out_h_ref.dtype)


def mblock_forward(hidden_states, residual, weight, gamma, beta, bias, *,
                   prefer_bf16_matmul=None, force_col_tile=None):
    """MBlock forward (Add -> LayerNorm -> Linear mixer).

    hidden_states / residual: (B, S, D); weight: (D, D) used as `normed @ weight`;
    gamma/beta/bias: (D,).  Returns (mixer_out (B,S,D) in input dtype, residual (B,S,D) f32).
    """
    B, S, D = hidden_states.shape
    R = B * S
    has_residual = residual is not None

    d_pad = _round_up(D, 128)                 # lane-dense last dim
    R_pad = max(R, 8)                         # only truly tiny inputs get row padding
    lane_extra = d_pad - D
    row_extra = R_pad - R

    # MXU operand dtype: bf16 when any operand is already bf16 (native MXU rate); an
    # explicit override lets f32 models opt into the faster bf16 path.
    if prefer_bf16_matmul is None:
        use_bf16_mm = (weight.dtype == jnp.bfloat16) or (hidden_states.dtype == jnp.bfloat16)
    else:
        use_bf16_mm = bool(prefer_bf16_matmul)
    mm_dtype = jnp.bfloat16 if use_bf16_mm else jnp.float32

    in_b = jnp.dtype(hidden_states.dtype).itemsize
    mm_b = jnp.dtype(mm_dtype).itemsize

    cap = _vmem_capacity_bytes()
    budget = int(cap * 0.75)                  # ~96 MiB on 128 MiB parts, ~48 MiB on v7x
    vmem_limit = int(cap * 0.85)

    if force_col_tile is not None:
        assert force_col_tile % 128 == 0 and d_pad % force_col_tile == 0

    single_buf_ok = _single_buffering_supported()
    row_tile, tn = _choose_tiles(R_pad, d_pad, in_b, mm_b, has_residual, budget,
                                 w_min_buf=1 if single_buf_ok else 2,
                                 force_tn=force_col_tile)
    weight_resident = (tn == d_pad)
    single_buffer = weight_resident and single_buf_ok
    grid = (pl.cdiv(R_pad, row_tile), d_pad // tn)

    # Host-side layout prep: reshape is free; pads only for unaligned D or tiny R.  The
    # row remainder is handled by a masked partial last grid block (no host pad/slice).
    def prep(x):
        x = x.reshape(R, D)
        if row_extra or lane_extra:
            x = jnp.pad(x, ((0, row_extra), (0, lane_extra)))
        return x

    h2 = prep(hidden_states)
    w2 = weight.astype(mm_dtype)              # cast once on the host for the MXU
    gb = jnp.stack([gamma.reshape(-1), beta.reshape(-1)]).astype(jnp.float32)
    b2 = bias.reshape(1, -1).astype(jnp.float32)
    if lane_extra:
        w2 = jnp.pad(w2, ((0, lane_extra), (0, lane_extra)))
        gb = jnp.pad(gb, ((0, 0), (0, lane_extra)))
        b2 = jnp.pad(b2, ((0, 0), (0, lane_extra)))

    def spec(shape, index_map, single=False):
        if single:
            return pl.BlockSpec(shape, index_map, pipeline_mode=pl.Buffered(1))
        return pl.BlockSpec(shape, index_map)

    row_spec = pl.BlockSpec((row_tile, d_pad), lambda i, j: (i, 0))
    in_specs = [row_spec]
    args = [h2]
    if has_residual:
        in_specs.append(row_spec)
        args.append(prep(residual))
    in_specs += [
        # Mixer weight: constant block index when resident -> DMA'd from HBM exactly
        # once; single-buffered (when supported) to halve its VMEM footprint (key on
        # v7x's 64 MiB VMEM).
        # TODO(synk): if profiling shows exposed weight DMA in the column-tiled fallback,
        # try pipeline_mode=pl.Buffered(3) on this spec.
        spec((d_pad, tn), lambda i, j: (0, j), single=single_buffer),
        spec((2, d_pad), lambda i, j: (0, 0), single=single_buffer),   # [gamma; beta]
        spec((1, tn), lambda i, j: (0, j), single=single_buffer),      # mixer bias
    ]
    args += [w2, gb, b2]

    kernel = _mblock_kernel if has_residual else _mblock_kernel_no_residual
    kernel = functools.partial(kernel, inv_d=1.0 / float(D), n_valid=D, lanes=d_pad)

    n_row_tiles = pl.cdiv(R_pad, row_tile)
    weight_bytes = d_pad * d_pad * mm_b * (1 if weight_resident else n_row_tiles)
    bytes_accessed = (R_pad * d_pad * in_b * (2 if has_residual else 1)   # inputs
                      + weight_bytes                                       # mixer weight
                      + R_pad * d_pad * in_b                               # mixer output
                      + R_pad * d_pad * 4)                                 # fp32 residual out

    out_h, out_r = pl.pallas_call(
        kernel,
        out_shape=(
            jax.ShapeDtypeStruct((R_pad, d_pad), hidden_states.dtype),
            jax.ShapeDtypeStruct((R_pad, d_pad), jnp.float32),             # residual_in_fp32
        ),
        grid_spec=pltpu.PrefetchScalarGridSpec(
            num_scalar_prefetch=0,
            grid=grid,
            in_specs=in_specs,
            out_specs=[
                pl.BlockSpec((row_tile, tn), lambda i, j: (i, j)),      # mixer output
                pl.BlockSpec((row_tile, d_pad), lambda i, j: (i, 0)),   # residual (resident over j)
            ],
            scratch_shapes=[pltpu.VMEM((row_tile, d_pad), mm_dtype)],   # cached `normed`
        ),
        compiler_params=pltpu.CompilerParams(
            dimension_semantics=("parallel", "arbitrary"),
            vmem_limit_bytes=vmem_limit,
        ),
        cost_estimate=pl.CostEstimate(
            flops=2 * R_pad * d_pad * d_pad + 10 * R_pad * d_pad,
            transcendentals=R_pad,
            bytes_accessed=int(bytes_accessed),
        ),
    )(*args)

    # NOTE(v5e): the j==0 step issues the fp32 residual store plus the first mixer-output
    # store; if a bundle dump shows vst-slot saturation there, stagger the residual write
    # across two inner steps.  Left as-is pending profile evidence.
    if row_extra or lane_extra:
        out_h = out_h[:R, :D]
        out_r = out_r[:R, :D]
    return out_h.reshape(B, S, D), out_r.reshape(B, S, D)


def _reference(hidden, residual, weight, gamma, beta, bias):
    h = hidden.astype(jnp.float32)
    r = residual.astype(jnp.float32) if residual is not None else None
    res = h + r if r is not None else h
    mean = jnp.mean(res, axis=-1, keepdims=True)
    var = jnp.mean((res - mean) ** 2, axis=-1, keepdims=True)
    normed = (res - mean) * jax.lax.rsqrt(var + EPS) * gamma + beta
    out = jnp.matmul(normed, weight.astype(jnp.float32),
                     precision=jax.lax.Precision.HIGHEST) + bias
    return out, res


if __name__ == "__main__":
    root = jax.random.PRNGKey(0)

    def make_inputs(case_id, B, S, D, dtype):
        ks = jax.random.split(jax.random.fold_in(root, case_id), 4)
        hidden = jax.random.normal(ks[0], (B, S, D), dtype=jnp.float32).astype(dtype)
        resid = jax.random.normal(ks[1], (B, S, D), dtype=jnp.float32).astype(dtype)
        weight = (jax.random.normal(ks[2], (D, D), dtype=jnp.float32) * (D ** -0.5)).astype(dtype)
        bias = jax.random.normal(ks[3], (D,), dtype=jnp.float32) * 0.01
        gamma = jnp.ones((D,), jnp.float32)       # nn.LayerNorm default weight
        beta = jnp.zeros((D,), jnp.float32)       # nn.LayerNorm default bias
        return hidden, resid, weight, gamma, beta, bias

    def check(case_id, B, S, D, dtype, with_residual, force_col_tile=None,
              h_tol=2e-4, r_tol=1e-6, relative=False):
        hidden, resid, weight, gamma, beta, bias = make_inputs(case_id, B, S, D, dtype)
        resid_in = resid if with_residual else None
        out_h, out_r = mblock_forward(hidden, resid_in, weight, gamma, beta, bias,
                                      force_col_tile=force_col_tile)
        jax.block_until_ready((out_h, out_r))
        ref_h, ref_r = _reference(hidden, resid_in, weight, gamma, beta, bias)
        assert out_h.shape == (B, S, D) and out_r.shape == (B, S, D)
        assert out_r.dtype == jnp.float32
        if relative:
            err = jnp.max(jnp.abs(out_h.astype(jnp.float32) - ref_h))
            scale = jnp.max(jnp.abs(ref_h)) + 1e-6
            assert err / scale < h_tol, f"case {case_id}: hidden rel err {err / scale}"
        else:
            assert jnp.allclose(out_h.astype(jnp.float32), ref_h, atol=h_tol, rtol=h_tol), \
                f"case {case_id}: hidden mismatch"
        assert jnp.allclose(out_r, ref_r, atol=r_tol, rtol=r_tol), \
            f"case {case_id}: residual mismatch"

    # 1. Small f32 block, residual provided (1x1 grid, weight resident).
    check(1, 2, 8, 32, jnp.float32, True)
    # 2. First block: residual is None (no zero-array DMA in this variant).
    check(2, 2, 8, 32, jnp.float32, False)
    # 3. bf16 activations + bf16 weight, D multiple of 128 (zero host pad/slice ops),
    #    rows not a multiple of the row tile (masked partial last block), bf16 MXU path.
    check(3, 2, 40, 256, jnp.bfloat16, True, h_tol=5e-2, relative=True)
    # 4. D not a multiple of 128 (lane pad + in-kernel lane mask) and forced column
    #    tiling (exercises the j > 0 cached-`normed` reuse path), partial row block.
    check(4, 2, 24, 200, jnp.float32, True, force_col_tile=128, h_tol=1e-3)

    # TODO(synk): the real mixer_cls in lit_gpt (e.g. a Mamba mixer) is not defined in this
    # module; a Linear(dim, dim) mixer is used as the synthetic stand-in. inference_params /
    # allocate_inference_cache have no Pallas equivalent here.

    print("KERNEL_OK")
</pallas_src>

<mosaic_0001>
module attributes {stable_mosaic.version = 11 : i64} {
  func.func @_copy(%arg0: i32, %arg1: memref<8x128xf32, #tpu.memory_space<vmem>>, %arg2: memref<8x128xf32, #tpu.memory_space<vmem>>) attributes {dimension_semantics = [#tpu.dimension_semantics<arbitrary>], iteration_bounds = array<i64: 1>, scalar_prefetch = 0 : i64, scratch_operands = 0 : i64, tpu.core_type = #tpu.core_type<tc>, window_params = [{pipeline_mode = #tpu.pipeline_mode<synchronous>, transform_indices = @transform_0, window_bounds = array<i64: 8, 128>}, {pipeline_mode = #tpu.pipeline_mode<synchronous>, transform_indices = @transform_1, window_bounds = array<i64: 8, 128>}]} {
    %c0 = arith.constant 0 : index
    %c0_0 = arith.constant 0 : index
    %0 = vector.load %arg1[%c0, %c0_0] : memref<8x128xf32, #tpu.memory_space<vmem>>, vector<8x128xf32>
    %c0_1 = arith.constant 0 : index
    %c0_2 = arith.constant 0 : index
    %1 = vector.load %arg2[%c0_1, %c0_2] : memref<8x128xf32, #tpu.memory_space<vmem>>, vector<8x128xf32>
    tpu.vector_store %arg2[%c0_1, %c0_2], %0 {strides = array<i32>} : memref<8x128xf32, #tpu.memory_space<vmem>>, vector<8x128xf32>,
    return
  }
  func.func @transform_0(%arg0: i32) -> (i32, i32) {
    %c0_i32 = arith.constant 0 : i32
    %c0_i32_0 = arith.constant 0 : i32
    %c0_i32_1 = arith.constant 0 : i32
    return %c0_i32, %c0_i32_0 : i32, i32
  }
  func.func @transform_1(%arg0: i32) -> (i32, i32) {
    %c0_i32 = arith.constant 0 : i32
    %c0_i32_0 = arith.constant 0 : i32
    %c0_i32_1 = arith.constant 0 : i32
    return %c0_i32, %c0_i32_0 : i32, i32
  }
}

module attributes {stable_mosaic.version = 11 : i64} {
  func.func @_mblock_kernel(%arg0: i32, %arg1: i32, %arg2: memref<16x128xf32, #tpu.memory_space<vmem>>, %arg3: memref<16x128xf32, #tpu.memory_space<vmem>>, %arg4: memref<128x128xf32, #tpu.memory_space<vmem>>, %arg5: memref<2x128xf32, #tpu.memory_space<vmem>>, %arg6: memref<1x128xf32, #tpu.memory_space<vmem>>, %arg7: memref<16x128xf32, #tpu.memory_space<vmem>>, %arg8: memref<16x128xf32, #tpu.memory_space<vmem>>, %arg9: memref<16x128xf32, #tpu.memory_space<vmem>>) attributes {dimension_semantics = [#tpu.dimension_semantics<parallel>, #tpu.dimension_semantics<arbitrary>], iteration_bounds = array<i64: 1, 1>, scalar_prefetch = 0 : i64, scratch_operands = 1 : i64, tpu.core_type = #tpu.core_type<tc>, window_params = [{transform_indices = @transform_0, window_bounds = array<i64: 16, 128>}, {transform_indices = @transform_1, window_bounds = array<i64: 16, 128>}, {transform_indices = @transform_2, window_bounds = array<i64: 128, 128>}, {pipeline_mode = #tpu.pipeline_mode<synchronous>, transform_indices = @transform_3, window_bounds = array<i64: 2, 128>}, {transform_indices = @transform_4, window_bounds = array<i64: 1, 128>}, {transform_indices = @transform_5, window_bounds = array<i64: 16, 128>}, {transform_indices = @transform_6, window_bounds = array<i64: 16, 128>}]} {
    %c0_i32 = arith.constant 0 : i32
    %0 = arith.cmpi eq, %arg1, %c0_i32 : i32
    %1 = arith.extui %0 : i1 to i32
    %c0_i32_0 = arith.constant 0 : i32
    %2 = arith.cmpi ne, %1, %c0_i32_0 : i32
    scf.if %2 {
      %c0_8 = arith.constant 0 : index
      %c0_9 = arith.constant 0 : index
      %10 = vector.load %arg2[%c0_8, %c0_9] : memref<16x128xf32, #tpu.memory_space<vmem>>, vector<16x128xf32>
      %c0_10 = arith.constant 0 : index
      %c0_11 = arith.constant 0 : index
      %11 = vector.load %arg3[%c0_10, %c0_11] : memref<16x128xf32, #tpu.memory_space<vmem>>, vector<16x128xf32>
      %12 = arith.addf %10, %11 : vector<16x128xf32>
      %c0_12 = arith.constant 0 : index
      %c0_13 = arith.constant 0 : index
      %13 = vector.load %arg8[%c0_12, %c0_13] : memref<16x128xf32, #tpu.memory_space<vmem>>, vector<16x128xf32>
      tpu.vector_store %arg8[%c0_12, %c0_13], %12 {strides = array<i32>} : memref<16x128xf32, #tpu.memory_space<vmem>>, vector<16x128xf32>,
      %cst_14 = arith.constant dense<0.000000e+00> : vector<16xf32>
      %14 = vector.multi_reduction <add>, %12, %cst_14 [1] : vector<16x128xf32> to vector<16xf32>
      %15 = vector.shape_cast %14 : vector<16xf32> to vector<16x1xf32>
      %cst_15 = arith.constant 3.125000e-02 : f32
      %16 = vector.broadcast %cst_15 : f32 to vector<16x1xf32>
      %17 = arith.mulf %15, %16 : vector<16x1xf32>
      %18 = vector.broadcast %17 : vector<16x1xf32> to vector<16x128xf32>
      %19 = arith.subf %12, %18 : vector<16x128xf32>
      %20 = tpu.iota {dimensions = array<i32: 1>} : vector<16x128xi32>
      %c32_i32 = arith.constant 32 : i32
      %21 = vector.broadcast %c32_i32 : i32 to vector<16x128xi32>
      %22 = arith.cmpi slt, %20, %21 : vector<16x128xi32>
      %cst_16 = arith.constant 0.000000e+00 : f32
      %23 = vector.broadcast %cst_16 : f32 to vector<16x128xf32>
      %24 = arith.select %22, %19, %23 : vector<16x128xi1>, vector<16x128xf32>
      %25 = arith.mulf %24, %24 : vector<16x128xf32>
      %cst_17 = arith.constant dense<0.000000e+00> : vector<16xf32>
      %26 = vector.multi_reduction <add>, %25, %cst_17 [1] : vector<16x128xf32> to vector<16xf32>
      %27 = vector.shape_cast %26 : vector<16xf32> to vector<16x1xf32>
      %cst_18 = arith.constant 3.125000e-02 : f32
      %28 = vector.broadcast %cst_18 : f32 to vector<16x1xf32>
      %29 = arith.mulf %27, %28 : vector<16x1xf32>
      %cst_19 = arith.constant 9.99999974E-6 : f32
      %30 = vector.broadcast %cst_19 : f32 to vector<16x1xf32>
      %31 = arith.addf %29, %30 : vector<16x1xf32>
      %32 = math.rsqrt %31 : vector<16x1xf32>
      %33 = vector.broadcast %32 : vector<16x1xf32> to vector<16x128xf32>
      %34 = arith.mulf %24, %33 : vector<16x128xf32>
      %c0_20 = arith.constant 0 : index
      %c0_21 = arith.constant 0 : index
      %35 = vector.load %arg5[%c0_20, %c0_21] : memref<2x128xf32, #tpu.memory_space<vmem>>, vector<1x128xf32>
      %36 = vector.broadcast %35 : vector<1x128xf32> to vector<16x128xf32>
      %37 = arith.mulf %34, %36 : vector<16x128xf32>
      %c1 = arith.constant 1 : index
      %c0_22 = arith.constant 0 : index
      %38 = vector.load %arg5[%c1, %c0_22] : memref<2x128xf32, #tpu.memory_space<vmem>>, vector<1x128xf32>
      %39 = vector.broadcast %38 : vector<1x128xf32> to vector<16x128xf32>
      %40 = arith.addf %37, %39 : vector<16x128xf32>
      %c0_23 = arith.constant 0 : index
      %c0_24 = arith.constant 0 : index
      %41 = vector.load %arg9[%c0_23, %c0_24] : memref<16x128xf32, #tpu.memory_space<vmem>>, vector<16x128xf32>
      tpu.vector_store %arg9[%c0_23, %c0_24], %40 {strides = array<i32>} : memref<16x128xf32, #tpu.memory_space<vmem>>, vector<16x128xf32>,
    } else {
    }
    %c0 = arith.constant 0 : index
    %c0_1 = arith.constant 0 : index
    %3 = vector.load %arg9[%c0, %c0_1] : memref<16x128xf32, #tpu.memory_space<vmem>>, vector<16x128xf32>
    %c0_2 = arith.constant 0 : index
    %c0_3 = arith.constant 0 : index
    %4 = vector.load %arg4[%c0_2, %c0_3] : memref<128x128xf32, #tpu.memory_space<vmem>>, vector<128x128xf32>
    %cst = arith.constant dense<0.000000e+00> : vector<16x128xf32>
    %5 = tpu.matmul %3, %4, %cst {dimension_numbers = #tpu.dot_dimension_numbers<[1], [0], [0], [1], [0, 0, 1, 1], [], []>} : vector<16x128xf32>, vector<128x128xf32>, vector<16x128xf32> -> vector<16x128xf32>
    %c0_4 = arith.constant 0 : index
    %c0_5 = arith.constant 0 : index
    %6 = vector.load %arg6[%c0_4, %c0_5] : memref<1x128xf32, #tpu.memory_space<vmem>>, vector<1x128xf32>
    %7 = vector.broadcast %6 : vector<1x128xf32> to vector<16x128xf32>
    %8 = arith.addf %5, %7 : vector<16x128xf32>
    %c0_6 = arith.constant 0 : index
    %c0_7 = arith.constant 0 : index
    %9 = vector.load %arg7[%c0_6, %c0_7] : memref<16x128xf32, #tpu.memory_space<vmem>>, vector<16x128xf32>
    tpu.vector_store %arg7[%c0_6, %c0_7], %8 {strides = array<i32>} : memref<16x128xf32, #tpu.memory_space<vmem>>, vector<16x128xf32>,
    return
  }
  func.func @transform_0(%arg0: i32, %arg1: i32) -> (i32, i32) {
    %c0_i32 = arith.constant 0 : i32
    %c0_i32_0 = arith.constant 0 : i32
    return %arg0, %c0_i32 : i32, i32
  }
  func.func @transform_1(%arg0: i32, %arg1: i32) -> (i32, i32) {
    %c0_i32 = arith.constant 0 : i32
    %c0_i32_0 = arith.constant 0 : i32
    return %arg0, %c0_i32 : i32, i32
  }
  func.func @transform_2(%arg0: i32, %arg1: i32) -> (i32, i32) {
    %c0_i32 = arith.constant 0 : i32
    %c0_i32_0 = arith.constant 0 : i32
    return %c0_i32, %arg1 : i32, i32
  }
  func.func @transform_3(%arg0: i32, %arg1: i32) -> (i32, i32) {
    %c0_i32 = arith.constant 0 : i32
    %c0_i32_0 = arith.constant 0 : i32
    %c0_i32_1 = arith.constant 0 : i32
    return %c0_i32, %c0_i32_0 : i32, i32
  }
  func.func @transform_4(%arg0: i32, %arg1: i32) -> (i32, i32) {
    %c0_i32 = arith.constant 0 : i32
    %c0_i32_0 = arith.constant 0 : i32
    return %c0_i32, %arg1 : i32, i32
  }
  func.func @transform_5(%arg0: i32, %arg1: i32) -> (i32, i32) {
    %c0_i32 = arith.constant 0 : i32
    return %arg0, %arg1 : i32, i32
  }
  func.func @transform_6(%arg0: i32, %arg1: i32) -> (i32, i32) {
    %c0_i32 = arith.constant 0 : i32
    %c0_i32_0 = arith.constant 0 : i32
    return %arg0, %c0_i32 : i32, i32
  }
}

</mosaic_0001>

<llo_original>
// kernel: tpu_custom_call.1
$region0: #{tpu_custom_call.1}
  #allocation0 [shape = 'u32[]', space=smem, size = 0x4, offset = 0x4, fixed_abs, tag = 'smem constant byte address 0x4 - core index']
  #allocation1 [shape = 'u32[144,128]{1,0:T(1,128)}', space=vmem, size = 0x12000, scoped, tag = 'internal scratch']
  %s0 = inlined_call_operand.hbm [shape: f32[8,128], index: 0, kind: input, shape index: {}]
  %s1 = inlined_call_operand.hbm [shape: f32[8,128], index: 1, kind: output, shape index: {}]
  %s2 = sld [smem:[#allocation0]]
  $region18: #{tpu_custom_call.1} parent=0
    _
  %s4 = ssub.s32 1, %s2
  %s5 = scalar_select 0, %s4, %s2
  $region1: #{tpu_custom_call.1} parent=0
    #allocation2 [shape = 'u8[4096]{0}', space=vmem, size = 0x1000, scoped, tag = 'input window, operand 0, single buffered']
    #allocation3 [shape = 's32[1]{0}', space=sflag, size = 0x4, scoped, tag = 'scoped memory for tpu_custom_call.1']
    #allocation4 [shape = 's32[1]{0}', space=sflag, size = 0x4, scoped, tag = 'scoped memory for tpu_custom_call.1']
    #allocation5 [shape = 'u8[4096]{0}', space=vmem, size = 0x1000, scoped, tag = 'output window, operand 0, single buffered']
    %6 = vsyncpa [#allocation3], 0
    %7 = vsyncpa [#allocation4], 0
    // Predicated region
    $region2: #{tpu_custom_call.1} parent=1 // pred_check
      _
    $region3: #{tpu_custom_call.1} parent=1 // pred_check_branch
      %9 = sbr.rel (0) target = $region5
    $region4: #{tpu_custom_call.1} parent=1 // pred_region
      %s11 = ssub.s32 128, 128
      %12 = vsyncadd [#allocation3], %s11
      %s14 = sshll.u32 [#allocation2], 4
      %s15 = int_to_ptr.vmem [resolvable:$true] %s14
      %17 = dma.hbm_to_vmem [thread:$0]  %s0, 128, %s15, [#allocation3]
    $region5: #{tpu_custom_call.1} parent=1 // pred_fallthru
      _
    // Predicated region
    $region6: #{tpu_custom_call.1} parent=1 // pred_check
      _
    $region7: #{tpu_custom_call.1} parent=1 // pred_check_branch
      %19 = sbr.rel (0) target = $region9
    $region8: #{tpu_custom_call.1} parent=1 // pred_region
      %20 = dma.done [#allocation3], 128
    $region9: #{tpu_custom_call.1} parent=1 // pred_fallthru
      _
    %v21 = vld [vmem:[#allocation2] sm:$0xff]
    %22 = vst [vmem:[#allocation5] sm:$0xff] %v21
    // Predicated region
    $region10: #{tpu_custom_call.1} parent=1 // pred_check
      _
    $region11: #{tpu_custom_call.1} parent=1 // pred_check_branch
      %24 = sbr.rel (0) target = $region13
    $region12: #{tpu_custom_call.1} parent=1 // pred_region
      %s26 = ssub.s32 128, 128
      %27 = vsyncadd [#allocation4], %s26
      %s29 = sshll.u32 [#allocation5], 4
      %s30 = int_to_ptr.vmem [resolvable:$true] %s29
      %32 = dma.vmem_to_hbm [thread:$0]  %s30, 128, %s1, [#allocation4]
    $region13: #{tpu_custom_call.1} parent=1 // pred_fallthru
      _
    // Predicated region
    $region14: #{tpu_custom_call.1} parent=1 // pred_check
      _
    $region15: #{tpu_custom_call.1} parent=1 // pred_check_branch
      %34 = sbr.rel (0) target = $region17
    $region16: #{tpu_custom_call.1} parent=1 // pred_region
      %35 = dma.done [#allocation4], 128
    $region17: #{tpu_custom_call.1} parent=1 // pred_fallthru
      _
    %36 = vsyncpa [#allocation3], 1
    %37 = vsyncpa [#allocation4], 1

// kernel: tpu_custom_call.1
$region0: #{tpu_custom_call.1}
  #allocation0 [shape = 'u32[]', space=smem, size = 0x4, offset = 0x4, fixed_abs, tag = 'smem constant byte address 0x4 - core index']
  #allocation1 [shape = 'u32[144,128]{1,0:T(1,128)}', space=vmem, size = 0x12000, scoped, tag = 'internal scratch']
  #allocation2 [shape = 'f32[16,128]{1,0:T(8,128)}', space=vmem, size = 0x2000, scoped, tag = 'scratch operand']
  %s0 = inlined_call_operand.hbm [shape: f32[16,128], index: 0, kind: input, shape index: {}]
  %s1 = inlined_call_operand.hbm [shape: f32[16,128], index: 1, kind: input, shape index: {}]
  %s2 = inlined_call_operand.hbm [shape: f32[128,128], index: 2, kind: input, shape index: {}]
  %s3 = inlined_call_operand.vmem [shape: f32[2,128], index: 3, kind: input, shape index: {}]
  %s4 = inlined_call_operand.vmem [shape: f32[1,128], index: 4, kind: input, shape index: {}]
  %s5 = inlined_call_operand.hbm [shape: f32[16,128], index: 5, kind: output, shape index: {0}]
  %s6 = inlined_call_operand.hbm [shape: f32[16,128], index: 6, kind: output, shape index: {1}]
  %7 = xla_tuple %s5, %s6
  %s8 = sld [smem:[#allocation0]]
  $region54: #{tpu_custom_call.1} parent=0
    _
  %s10 = ssub.s32 1, %s8
  %s11 = scalar_select 0, %s10, %s8
  $region1: #{tpu_custom_call.1} parent=0
    #allocation3 [shape = 'u8[8192]{0}', space=vmem, size = 0x2000, scoped, tag = 'input window, operand 0, single buffered']
    #allocation4 [shape = 's32[1]{0}', space=sflag, size = 0x4, scoped, tag = 'scoped memory for tpu_custom_call.1']
    #allocation5 [shape = 's32[1]{0}', space=sflag, size = 0x4, scoped, tag = 'scoped memory for tpu_custom_call.1']
    #allocation6 [shape = 'u8[8192]{0}', space=vmem, size = 0x2000, scoped, tag = 'input window, operand 1, single buffered']
    #allocation7 [shape = 's32[1]{0}', space=sflag, size = 0x4, scoped, tag = 'scoped memory for tpu_custom_call.1']
    #allocation8 [shape = 'u8[65536]{0}', space=vmem, size = 0x10000, scoped, tag = 'input window, operand 2, single buffered']
    #allocation9 [shape = 'u8[8192]{0}', space=vmem, size = 0x2000, scoped, tag = 'output window, operand 0, single buffered']
    #allocation10 [shape = 'u8[8192]{0}', space=vmem, size = 0x2000, scoped, tag = 'output window, operand 1, single buffered']
    #allocation11 [shape = 's32[1]{0}', space=sflag, size = 0x4, scoped, tag = 'scoped memory for tpu_custom_call.1']
    %12 = vsyncpa [#allocation4], 0
    %13 = vsyncpa [#allocation7], 0
    %14 = vsyncpa [#allocation5], 0
    %15 = vsyncpa [#allocation11], 0
    // Predicated region
    $region2: #{tpu_custom_call.1} parent=1 // pred_check
      _
    $region3: #{tpu_custom_call.1} parent=1 // pred_check_branch
      %17 = sbr.rel (0) target = $region5
    $region4: #{tpu_custom_call.1} parent=1 // pred_region
      %s19 = ssub.s32 256, 256
      %20 = vsyncadd [#allocation4], %s19
      %s21 = sshll.u32 [#allocation3], 4
      %s22 = int_to_ptr.vmem [resolvable:$true] %s21
      %27 = dma.hbm_to_vmem [thread:$0]  %s0, 256, %s22, [#allocation4], 128, 128, 8
    $region5: #{tpu_custom_call.1} parent=1 // pred_fallthru
      _
    // Predicated region
    $region6: #{tpu_custom_call.1} parent=1 // pred_check
      _
    $region7: #{tpu_custom_call.1} parent=1 // pred_check_branch
      %29 = sbr.rel (0) target = $region9
    $region8: #{tpu_custom_call.1} parent=1 // pred_region
      %s31 = ssub.s32 256, 256
      %32 = vsyncadd [#allocation7], %s31
      %s33 = sshll.u32 [#allocation6], 4
      %s34 = int_to_ptr.vmem [resolvable:$true] %s33
      %39 = dma.hbm_to_vmem [thread:$0]  %s1, 256, %s34, [#allocation7], 128, 128, 8
    $region9: #{tpu_custom_call.1} parent=1 // pred_fallthru
      _
    // Predicated region
    $region10: #{tpu_custom_call.1} parent=1 // pred_check
      _
    $region11: #{tpu_custom_call.1} parent=1 // pred_check_branch
      %41 = sbr.rel (0) target = $region13
    $region12: #{tpu_custom_call.1} parent=1 // pred_region
      %s43 = ssub.s32 2048, 2048
      %44 = vsyncadd [#allocation7], %s43
      %s45 = sshll.u32 [#allocation8], 4
      %s46 = int_to_ptr.vmem [resolvable:$true] %s45
      %51 = dma.hbm_to_vmem [thread:$0]  %s2, 2048, %s46, [#allocation7], 128, 128, 8
    $region13: #{tpu_custom_call.1} parent=1 // pred_fallthru
      _
    // Predicated region
    $region14: #{tpu_custom_call.1} parent=1 // pred_check
      _
    $region15: #{tpu_custom_call.1} parent=1 // pred_check_branch
      %53 = sbr.rel (0) target = $region17
    $region16: #{tpu_custom_call.1} parent=1 // pred_region
      _
    $region17: #{tpu_custom_call.1} parent=1 // pred_fallthru
      _
    // Predicated region
    $region18: #{tpu_custom_call.1} parent=1 // pred_check
      _
    $region19: #{tpu_custom_call.1} parent=1 // pred_check_branch
      %55 = sbr.rel (0) target = $region21
    $region20: #{tpu_custom_call.1} parent=1 // pred_region
      _
    $region21: #{tpu_custom_call.1} parent=1 // pred_fallthru
      _
    // Predicated region
    $region22: #{tpu_custom_call.1} parent=1 // pred_check
      _
    $region23: #{tpu_custom_call.1} parent=1 // pred_check_branch
      %57 = sbr.rel (0) target = $region25
    $region24: #{tpu_custom_call.1} parent=1 // pred_region
      %58 = dma.done [#allocation4], 256
    $region25: #{tpu_custom_call.1} parent=1 // pred_fallthru
      _
    // Predicated region
    $region26: #{tpu_custom_call.1} parent=1 // pred_check
      _
    $region27: #{tpu_custom_call.1} parent=1 // pred_check_branch
      %60 = sbr.rel (0) target = $region29
    $region28: #{tpu_custom_call.1} parent=1 // pred_region
      %61 = dma.done [#allocation7], 256
    $region29: #{tpu_custom_call.1} parent=1 // pred_fallthru
      _
    // Predicated region
    $region30: #{tpu_custom_call.1} parent=1 // pred_check
      _
    $region31: #{tpu_custom_call.1} parent=1 // pred_check_branch
      %63 = sbr.rel (0) target = $region33
    $region32: #{tpu_custom_call.1} parent=1 // pred_region
      %64 = dma.done [#allocation7], 2048
    $region33: #{tpu_custom_call.1} parent=1 // pred_fallthru
      _
    %p65 = scmp.eq.s32.totalorder 0, 0
    // Predicated region
    $region34: #{tpu_custom_call.1} parent=1 // pred_check
      %p66 = pneg %p65
    $region35: #{tpu_custom_call.1} parent=1 // pred_check_branch
      %68 = sbr.rel (%p66) target = $region37
    $region36: #{tpu_custom_call.1} parent=1 // pred_region
      %v69 = vld [vmem:[#allocation3] sm:$0xff]
      %v70 = vld [vmem:[#allocation3 + $0x8] sm:$0xff]
      %v71 = vld [vmem:[#allocation6] sm:$0xff]
      %v72 = vld [vmem:[#allocation6 + $0x8] sm:$0xff]
      %v73 = vadd.f32 %v69, %v71
      %v74 = vadd.f32 %v70, %v72
      %75 = vst [vmem:[#allocation10] sm:$0xff] %v73
      %76 = vst [vmem:[#allocation10 + $0x8] sm:$0xff] %v74
      %77 = vadd.xlane.f32.xlu0 %v73
      %v78 = vpop.xlane.xlu0 %77
      %79 = vadd.xlane.f32.xlu0 %v74
      %v80 = vpop.xlane.xlu0 %79
      %v81 = vmul.f32 %v78, 0.03125
      %v82 = vmul.f32 %v80, 0.03125
      %v83 = vsub.f32 %v73, %v81
      %v84 = vsub.f32 %v74, %v82
      %v85 = vlaneseq
      %v86 = vand.u32 %v85, 127
      %vm87 = vcmp.lt.s32.totalorder %v86, 32
      %v88 = vsel %vm87, %v83, 0.0
      %v89 = vsel %vm87, %v84, 0.0
      %v90 = vmul.f32 %v88, %v88
      %v91 = vmul.f32 %v89, %v89
      %92 = vadd.xlane.f32.xlu0 %v90
      %v93 = vpop.xlane.xlu0 %92
      %94 = vadd.xlane.f32.xlu0 %v91
      %v95 = vpop.xlane.xlu0 %94
      %v96 = vmul.f32 %v93, 0.03125
      %v97 = vmul.f32 %v95, 0.03125
      %v98 = vadd.f32 %v96, 1e-05
      %v99 = vadd.f32 %v97, 1e-05
      %v100 = vrsqrt.pop %v98
      %v101 = vrsqrt.pop %v99
      %v102 = vmul.f32 %v88, %v100
      %v103 = vmul.f32 %v89, %v101
      %v104 = vld [vmem:[%s3] sm:$0x1]
      %v105 = vlaneseq
      %v106 = vshrl.u32 %v105, 7
      %v107 = vsub.s32 0, %v106
      %v108 = vrot.slane %v104, %v107
      %v109 = vmul.f32 %v102, %v108
      %v110 = vmul.f32 %v103, %v108
      %v111 = vld [vmem:[%s3 + $0x1] sm:$0x1]
      %v112 = vlaneseq
      %v113 = vshrl.u32 %v112, 7
      %v114 = vsub.s32 0, %v113
      %v115 = vrot.slane %v111, %v114
      %v116 = vadd.f32 %v109, %v115
      %v117 = vadd.f32 %v110, %v115
      %118 = vst [vmem:[#allocation2] sm:$0xff] %v116
      %119 = vst [vmem:[#allocation2 + $0x8] sm:$0xff] %v117
    $region37: #{tpu_custom_call.1} parent=1 // pred_fallthru
      _
    %v120 = vld [vmem:[#allocation2] sm:$0xff]
    %v121 = vld [vmem:[#allocation2 + $0x8] sm:$0xff]
    %v122 = vld [vmem:[#allocation8] sm:$0xff]
    %v123 = vld [vmem:[#allocation8 + $0x8] sm:$0xff]
    %v124 = vld [vmem:[#allocation8 + $0x10] sm:$0xff]
    %v125 = vld [vmem:[#allocation8 + $0x18] sm:$0xff]
    %v126 = vld [vmem:[#allocation8 + $0x20] sm:$0xff]
    %v127 = vld [vmem:[#allocation8 + $0x28] sm:$0xff]
    %v128 = vld [vmem:[#allocation8 + $0x30] sm:$0xff]
    %v129 = vld [vmem:[#allocation8 + $0x38] sm:$0xff]
    %v130 = vld [vmem:[#allocation8 + $0x40] sm:$0xff]
    %v131 = vld [vmem:[#allocation8 + $0x48] sm:$0xff]
    %v132 = vld [vmem:[#allocation8 + $0x50] sm:$0xff]
    %v133 = vld [vmem:[#allocation8 + $0x58] sm:$0xff]
    %v134 = vld [vmem:[#allocation8 + $0x60] sm:$0xff]
    %v135 = vld [vmem:[#allocation8 + $0x68] sm:$0xff]
    %v136 = vld [vmem:[#allocation8 + $0x70] sm:$0xff]
    %v137 = vld [vmem:[#allocation8 + $0x78] sm:$0xff]
    %v138 = vld [vmem:[%s4] sm:$0x1]
    %v140 = vlaneseq
    %v141 = vshrl.u32 %v140, 7
    %v142 = vsub.s32 0, %v141
    %v143 = vrot.slane %v138, %v142
    %145 = vmatprep.subr.mxu0 0.0
    %146 = vmatpush1.msra.mxu0 %v122
    %147 = vmatprep.subr.mxu0 0.0
    %148 = vmatpush1.msra.mxu0 %v123
    %149 = vmatprep.subr.mxu0 0.0
    %150 = vmatpush1.msra.mxu0 %v124
    %151 = vmatprep.subr.mxu0 0.0
    %152 = vmatpush1.msra.mxu0 %v125
    %153 = vmatprep.subr.mxu0 0.0
    %154 = vmatpush1.msra.mxu0 %v126
    %155 = vmatprep.subr.mxu0 0.0
    %156 = vmatpush1.msra.mxu0 %v127
    %157 = vmatprep.subr.mxu0 0.0
    %158 = vmatpush1.msra.mxu0 %v128
    %159 = vmatprep.subr.mxu0 0.0
    %160 = vmatpush1.msra.mxu0 %v129
    %161 = vmatprep.subr.mxu0 0.0
    %162 = vmatpush1.msra.mxu0 %v130
    %163 = vmatprep.subr.mxu0 0.0
    %164 = vmatpush1.msra.mxu0 %v131
    %165 = vmatprep.subr.mxu0 0.0
    %166 = vmatpush1.msra.mxu0 %v132
    %167 = vmatprep.subr.mxu0 0.0
    %168 = vmatpush1.msra.mxu0 %v133
    %169 = vmatprep.subr.mxu0 0.0
    %170 = vmatpush1.msra.mxu0 %v134
    %171 = vmatprep.subr.mxu0 0.0
    %172 = vmatpush1.msra.mxu0 %v135
    %173 = vmatprep.subr.mxu0 0.0
    %174 = vmatpush1.msra.mxu0 %v136
    %175 = vmatprep.subr.mxu0 0.0
    %176 = vmatpush1.msra.mxu0 %v137
    %177 = vmatprep.subr.mxu0 0.0
    %178 = vmatpush1.msra.mxu0 0.0
    %179 = vmatprep.subr.mxu0 0.0
    %180 = vmatpush1.msra.mxu0 0.0
    %181 = vmatprep.subr.mxu0 0.0
    %182 = vmatpush1.msra.mxu0 0.0
    %183 = vmatprep.subr.mxu0 0.0
    %184 = vmatpush1.msra.mxu0 0.0
    %185 = vmatprep.subr.mxu0 0.0
    %186 = vmatpush1.msra.mxu0 0.0
    %187 = vmatprep.subr.mxu0 0.0
    %188 = vmatpush1.msra.mxu0 0.0
    %189 = vmatprep.subr.mxu0 0.0
    %190 = vmatpush1.msra.mxu0 0.0
    %191 = vmatprep.subr.mxu0 0.0
    %192 = vmatpush1.msra.mxu0 0.0
    %193 = vmatprep.subr.mxu0 0.0
    %194 = vmatpush1.msra.mxu0 0.0
    %195 = vmatprep.subr.mxu0 0.0
    %196 = vmatpush1.msra.mxu0 0.0
    %197 = vmatprep.subr.mxu0 0.0
    %198 = vmatpush1.msra.mxu0 0.0
    %199 = vmatprep.subr.mxu0 0.0
    %200 = vmatpush1.msra.mxu0 0.0
    %201 = vmatprep.subr.mxu0 0.0
    %202 = vmatpush1.msra.mxu0 0.0
    %203 = vmatprep.subr.mxu0 0.0
    %204 = vmatpush1.msra.mxu0 0.0
    %205 = vmatprep.subr.mxu0 0.0
    %206 = vmatpush1.msra.mxu0 0.0
    %207 = vmatprep.subr.mxu0 0.0
    %208 = vmatpush1.msra.mxu0 0.0
    %209 = vmatprep.mubr.f32.mxu0 0.0
    %210 = vmatmul.mubr.f32.gmra.mrb[0].mxu0 %v120
    %v211 = vpop.f32.mrb[0].mxu0
    %v212 = vadd.f32 %v143, %v211
    %v213 = vpop.f32.mrb[0].mxu0
    %214 = vmatprep.mubr.f32.mxu0 0.0
    %215 = vmatmul.mubr.f32.gmra.mrb[0].mxu0 %v121
    %v216 = vpop.f32.mrb[0].mxu0
    %v217 = vadd.f32 %v143, %v216
    %v218 = vpop.f32.mrb[0].mxu0
    %219 = vdwg.mxu0
    %220 = vst [vmem:[#allocation9] sm:$0xff] %v212
    %221 = vst [vmem:[#allocation9 + $0x8] sm:$0xff] %v217
    // Predicated region
    $region38: #{tpu_custom_call.1} parent=1 // pred_check
      _
    $region39: #{tpu_custom_call.1} parent=1 // pred_check_branch
      %223 = sbr.rel (0) target = $region41
    $region40: #{tpu_custom_call.1} parent=1 // pred_region
      %s225 = ssub.s32 256, 256
      %226 = vsyncadd [#allocation5], %s225
      %s227 = sshll.u32 [#allocation9], 4
      %s228 = int_to_ptr.vmem [resolvable:$true] %s227
      %233 = dma.vmem_to_hbm [thread:$0]  %s228, 256, %s5, [#allocation5], 128, 128, 8
    $region41: #{tpu_custom_call.1} parent=1 // pred_fallthru
      _
    // Predicated region
    $region42: #{tpu_custom_call.1} parent=1 // pred_check
      _
    $region43: #{tpu_custom_call.1} parent=1 // pred_check_branch
      %235 = sbr.rel (0) target = $region45
    $region44: #{tpu_custom_call.1} parent=1 // pred_region
      %s237 = ssub.s32 256, 256
      %238 = vsyncadd [#allocation11], %s237
      %s239 = sshll.u32 [#allocation10], 4
      %s240 = int_to_ptr.vmem [resolvable:$true] %s239
      %245 = dma.vmem_to_hbm [thread:$0]  %s240, 256, %s6, [#allocation11], 128, 128, 8
    $region45: #{tpu_custom_call.1} parent=1 // pred_fallthru
      _
    // Predicated region
    $region46: #{tpu_custom_call.1} parent=1 // pred_check
      _
    $region47: #{tpu_custom_call.1} parent=1 // pred_check_branch
      %247 = sbr.rel (0) target = $region49
    $region48: #{tpu_custom_call.1} parent=1 // pred_region
      %248 = dma.done [#allocation5], 256
    $region49: #{tpu_custom_call.1} parent=1 // pred_fallthru
      _
    // Predicated region
    $region50: #{tpu_custom_call.1} parent=1 // pred_check
      _
    $region51: #{tpu_custom_call.1} parent=1 // pred_check_branch
      %250 = sbr.rel (0) target = $region53
    $region52: #{tpu_custom_call.1} parent=1 // pred_region
      %251 = dma.done [#allocation11], 256
    $region53: #{tpu_custom_call.1} parent=1 // pred_fallthru
      _
    %252 = vsyncpa [#allocation4], 1
    %253 = vsyncpa [#allocation7], 1
    %254 = vsyncpa [#allocation5], 1
    %255 = vsyncpa [#allocation11], 1

</llo_original>
